<compile_context>
chip_gen: v5e
topology: v5e:2x2
jax: 0.10.0
libtpu: 0.0.40
codegen_flags: <defaults>
</compile_context>

<pallas_src>
import jax
import jax.numpy as jnp
from jax.experimental import pallas as pl
from jax.experimental.pallas import tpu as pltpu

# Safe on v7x (64 MiB physical VMEM) as well as v5e/v6e (128 MiB).
_VMEM_LIMIT = 32 * 1024 * 1024


# ---------------------------------------------------------------------------
# Tiled matmul: o[M, N] = x[M, K] @ w[K, N]   (f32 accumulation on the MXU)
# ---------------------------------------------------------------------------
def _matmul_kernel_acc(x_ref, w_ref, o_ref, acc_ref):
    """K is split across grid axis 2 -> accumulate in resident f32 scratch."""
    @pl.when(pl.program_id(2) == 0)
    def _init():
        acc_ref[...] = jnp.zeros_like(acc_ref)

    acc_ref[...] += jnp.dot(
        x_ref[...], w_ref[...], preferred_element_type=jnp.float32
    )

    @pl.when(pl.program_id(2) == pl.num_programs(2) - 1)
    def _finalize():
        o_ref[...] = acc_ref[...].astype(o_ref.dtype)


def _matmul_kernel_single_k(x_ref, w_ref, o_ref):
    """K fits in one tile -> write the MXU result directly (no scratch, no revisits)."""
    o_ref[...] = jnp.dot(
        x_ref[...], w_ref[...], preferred_element_type=jnp.float32
    ).astype(o_ref.dtype)


def pallas_matmul(x, w, *, tm=512, tn=512, tk=512):
    """o = x @ w, tiled over (M, N[, K])."""
    M, K = x.shape
    K2, N = w.shape
    assert K == K2, (x.shape, w.shape)
    tm, tn, tk = min(tm, M), min(tn, N), min(tk, K)
    gm, gn, gk = pl.cdiv(M, tm), pl.cdiv(N, tn), pl.cdiv(K, tk)
    cost = pl.CostEstimate(
        flops=2 * M * N * K,
        transcendentals=0,
        bytes_accessed=4 * (M * K + K * N + M * N),
    )

    if gk == 1:
        # Fast path: whole contraction in one MXU call per output tile.
        return pl.pallas_call(
            _matmul_kernel_single_k,
            out_shape=jax.ShapeDtypeStruct((M, N), x.dtype),
            grid_spec=pltpu.PrefetchScalarGridSpec(
                num_scalar_prefetch=0,
                grid=(gm, gn),
                in_specs=[
                    pl.BlockSpec((tm, K), lambda i, j: (i, 0)),
                    pl.BlockSpec((K, tn), lambda i, j: (0, j)),
                ],
                out_specs=pl.BlockSpec((tm, tn), lambda i, j: (i, j)),
            ),
            compiler_params=pltpu.CompilerParams(
                dimension_semantics=("parallel", "parallel"),
                vmem_limit_bytes=_VMEM_LIMIT,
            ),
            cost_estimate=cost,
        )(x, w)

    return pl.pallas_call(
        _matmul_kernel_acc,
        out_shape=jax.ShapeDtypeStruct((M, N), x.dtype),
        grid_spec=pltpu.PrefetchScalarGridSpec(
            num_scalar_prefetch=0,
            grid=(gm, gn, gk),
            in_specs=[
                pl.BlockSpec((tm, tk), lambda i, j, k: (i, k)),
                pl.BlockSpec((tk, tn), lambda i, j, k: (k, j)),
            ],
            out_specs=pl.BlockSpec((tm, tn), lambda i, j, k: (i, j)),
            scratch_shapes=[pltpu.VMEM((tm, tn), jnp.float32)],
        ),
        compiler_params=pltpu.CompilerParams(
            dimension_semantics=("parallel", "parallel", "arbitrary"),
            vmem_limit_bytes=_VMEM_LIMIT,
        ),
        cost_estimate=cost,
    )(x, w)


# ---------------------------------------------------------------------------
# 1x1 conv, NCHW-native (no transpose pair): y[n, oc, hw] = W[oc, ic] @ x[n, ic, hw]
# ---------------------------------------------------------------------------
def _conv1x1_kernel(x_ref, w_ref, o_ref):
    # x_ref: (1, C_in, t_hw), w_ref: (C_out, C_in), o_ref: (1, C_out, t_hw)
    y = jnp.dot(w_ref[...], x_ref[0], preferred_element_type=jnp.float32)
    o_ref[0] = y.astype(o_ref.dtype)


def adaptor_conv1x1(x_nchw, w_oi):
    """nn.Conv2d(128, 128, 1, bias=False), weight in native PyTorch [out_ch, in_ch]."""
    N, C, H, W = x_nchw.shape
    C_out, C_in = w_oi.shape
    assert C == C_in, (x_nchw.shape, w_oi.shape)
    HW = H * W
    x = x_nchw.reshape(N, C, HW)  # pure reshape — no data movement / transpose ops
    # Lane-dense tiles when the feature map allows it; otherwise one full-HW block
    # (legal because the block dim equals the full array dim).
    t_hw = min(512, HW) if HW % 128 == 0 else HW
    grid = (N, pl.cdiv(HW, t_hw))
    y = pl.pallas_call(
        _conv1x1_kernel,
        out_shape=jax.ShapeDtypeStruct((N, C_out, HW), x.dtype),
        grid_spec=pltpu.PrefetchScalarGridSpec(
            num_scalar_prefetch=0,
            grid=grid,
            in_specs=[
                pl.BlockSpec((1, C, t_hw), lambda n, j: (n, 0, j)),
                pl.BlockSpec((C_out, C_in), lambda n, j: (0, 0)),
            ],
            out_specs=pl.BlockSpec((1, C_out, t_hw), lambda n, j: (n, 0, j)),
        ),
        compiler_params=pltpu.CompilerParams(
            dimension_semantics=("parallel", "parallel"),
            vmem_limit_bytes=_VMEM_LIMIT,
        ),
        cost_estimate=pl.CostEstimate(
            flops=2 * N * HW * C_out * C_in,
            transcendentals=0,
            bytes_accessed=4 * (N * C * HW + C_out * C_in + N * C_out * HW),
        ),
    )(x, w_oi)
    return y.reshape(N, C_out, H, W)


def head_linear(x, w_kn):
    """nn.Linear(489, 512, bias=False): y = x @ W.T with W.T pre-stored (+K zero-pad)."""
    M, K = x.shape
    Kp = w_kn.shape[0]
    if Kp != K:
        # Contraction dim was zero-padded once at init (489 -> 512); pad activations to
        # match.  Numerically a no-op, keeps loads (8,128)-aligned (tiny pad, M rows).
        x = jnp.pad(x, ((0, 0), (0, Kp - K)))
    return pallas_matmul(x, w_kn)


class FaceModel:
    """JAX/Pallas port of the PyTorch FaceModel."""

    def __init__(self, backbone_forward, key):
        k1, k2 = jax.random.split(key)
        # adaptor: Conv2d(128, 128, 1, bias=False); nn.init.normal_(w, 0, 0.1).
        # Stored [out_ch, in_ch] (1x1 spatial squeezed) and used as-is (W @ x),
        # so no call-time transpose is ever emitted.
        self.adaptor_w = 0.1 * jax.random.normal(k1, (128, 128), dtype=jnp.float32)
        # head: Linear(489, 512, bias=False); PyTorch default U(-1/sqrt(in), 1/sqrt(in)).
        bound = 1.0 / float(jnp.sqrt(489.0))
        w_oi = jax.random.uniform(
            k2, (512, 489), dtype=jnp.float32, minval=-bound, maxval=bound
        )
        # Pre-transpose to [K, N] and zero-pad K 489 -> 512 once at init so the hot
        # path has neither a transpose op nor masked lane loads.
        self.head_in_features = 489
        self.head_w_kn = (
            jnp.zeros((512, 512), dtype=jnp.float32).at[:489, :].set(w_oi.T)
        )
        self.backbone = backbone_forward

    def forward(self, data):
        # Matches the PyTorch forward exactly: only the backbone is invoked;
        # adaptor and head are initialized but unused in forward().
        feat = self.backbone(data)
        return feat


if __name__ == "__main__":
    key = jax.random.PRNGKey(0)
    k_data, k_head_in, k_model = jax.random.split(key, 3)

    # TODO(synk): backbone_factory architecture is injected externally and not
    # defined in this module; treated as identity here.
    model = FaceModel(backbone_forward=lambda x: x, key=k_model)

    # Small NCHW input consistent with the adaptor's 128 input channels.
    data = jax.random.normal(k_data, (2, 128, 8, 8), dtype=jnp.float32)

    # Exact forward semantics (backbone pass-through).
    feat = model.forward(data)

    # Exercise the Pallas kernels for the concretely-defined layers.
    adaptor_out = adaptor_conv1x1(data, model.adaptor_w)          # [2, 128, 8, 8]
    head_in = jax.random.normal(k_head_in, (2, 489), dtype=jnp.float32)
    head_out = head_linear(head_in, model.head_w_kn)              # [2, 512]

    jax.block_until_ready((feat, adaptor_out, head_out))

    assert feat.shape == (2, 128, 8, 8)
    assert adaptor_out.shape == (2, 128, 8, 8)
    assert head_out.shape == (2, 512)

    # Numerical checks against plain-JAX references.
    adaptor_ref = jnp.einsum("oi,nihw->nohw", model.adaptor_w, data)
    head_ref = head_in @ model.head_w_kn[:489, :]
    assert jnp.allclose(adaptor_out, adaptor_ref, atol=1e-3, rtol=1e-3)
    assert jnp.allclose(head_out, head_ref, atol=1e-3, rtol=1e-3)

    print("KERNEL_OK")
</pallas_src>

<mosaic_0001>
module attributes {stable_mosaic.version = 11 : i64} {
  func.func @_conv1x1_kernel(%arg0: i32, %arg1: i32, %arg2: memref<1x128x64xf32, #tpu.memory_space<vmem>>, %arg3: memref<128x128xf32, #tpu.memory_space<vmem>>, %arg4: memref<1x128x64xf32, #tpu.memory_space<vmem>>) attributes {dimension_semantics = [#tpu.dimension_semantics<parallel>, #tpu.dimension_semantics<parallel>], iteration_bounds = array<i64: 2, 1>, scalar_prefetch = 0 : i64, scratch_operands = 0 : i64, tpu.core_type = #tpu.core_type<tc>, window_params = [{transform_indices = @transform_0, window_bounds = array<i64: 1, 128, 64>}, {pipeline_mode = #tpu.pipeline_mode<synchronous>, transform_indices = @transform_1, window_bounds = array<i64: 128, 128>}, {transform_indices = @transform_2, window_bounds = array<i64: 1, 128, 64>}]} {
    %c0 = arith.constant 0 : index
    %c0_0 = arith.constant 0 : index
    %0 = vector.load %arg3[%c0, %c0_0] : memref<128x128xf32, #tpu.memory_space<vmem>>, vector<128x128xf32>
    %c0_1 = arith.constant 0 : index
    %c0_2 = arith.constant 0 : index
    %c0_3 = arith.constant 0 : index
    %1 = vector.load %arg2[%c0_1, %c0_2, %c0_3] : memref<1x128x64xf32, #tpu.memory_space<vmem>>, vector<1x128x64xf32>
    %2 = vector.shape_cast %1 : vector<1x128x64xf32> to vector<128x64xf32>
    %cst = arith.constant dense<0.000000e+00> : vector<128x64xf32>
    %3 = tpu.matmul %0, %2, %cst {dimension_numbers = #tpu.dot_dimension_numbers<[1], [0], [0], [1], [0, 0, 1, 1], [], []>} : vector<128x128xf32>, vector<128x64xf32>, vector<128x64xf32> -> vector<128x64xf32>
    %c0_4 = arith.constant 0 : index
    %c0_5 = arith.constant 0 : index
    %c0_6 = arith.constant 0 : index
    %4 = vector.load %arg4[%c0_4, %c0_5, %c0_6] : memref<1x128x64xf32, #tpu.memory_space<vmem>>, vector<1x128x64xf32>
    %5 = vector.shape_cast %4 : vector<1x128x64xf32> to vector<128x64xf32>
    %6 = vector.shape_cast %3 : vector<128x64xf32> to vector<1x128x64xf32>
    tpu.vector_store %arg4[%c0_4, %c0_5, %c0_6], %6 {strides = array<i32>} : memref<1x128x64xf32, #tpu.memory_space<vmem>>, vector<1x128x64xf32>,
    return
  }
  func.func @transform_0(%arg0: i32, %arg1: i32) -> (i32, i32, i32) {
    %c0_i32 = arith.constant 0 : i32
    %c0_i32_0 = arith.constant 0 : i32
    return %arg0, %c0_i32, %arg1 : i32, i32, i32
  }
  func.func @transform_1(%arg0: i32, %arg1: i32) -> (i32, i32) {
    %c0_i32 = arith.constant 0 : i32
    %c0_i32_0 = arith.constant 0 : i32
    %c0_i32_1 = arith.constant 0 : i32
    return %c0_i32, %c0_i32_0 : i32, i32
  }
  func.func @transform_2(%arg0: i32, %arg1: i32) -> (i32, i32, i32) {
    %c0_i32 = arith.constant 0 : i32
    %c0_i32_0 = arith.constant 0 : i32
    return %arg0, %c0_i32, %arg1 : i32, i32, i32
  }
}

</mosaic_0001>

<llo_original>
// kernel: tpu_custom_call.1
$region0: #{tpu_custom_call.1}
  #allocation0 [shape = 'u32[]', space=smem, size = 0x4, offset = 0x4, fixed_abs, tag = 'smem constant byte address 0x4 - core index']
  #allocation1 [shape = 'u32[72,128]{1,0:T(1,128)}', space=vmem, size = 0x9000, scoped, tag = 'internal scratch']
  %s0 = inlined_call_operand.vmem [shape: f32[2,128,64], index: 0, kind: input, shape index: {}]
  %s1 = inlined_call_operand.vmem [shape: f32[128,128], index: 1, kind: input, shape index: {}]
  %s2 = inlined_call_operand.vmem [shape: f32[2,128,64], index: 2, kind: output, shape index: {}]
  %s3 = sld [smem:[#allocation0]]
  $region41: #{tpu_custom_call.1} parent=0
    _
  %s5 = ssub.s32 1, %s3
  %s6 = scalar_select 0, %s5, %s3
  loop: start=0, step=1, limit=4
  $region2: #{tpu_custom_call.1} parent=0 // loop_pre_header
    _
  $region3: #{tpu_custom_call.1} parent=0 // loop_header
    %s8 = sphi 0, %s12
    %p9 = scmp.ge.s32.totalorder %s8, 4
    %s15 = sphi 0, %s27
    %s16 = sphi 0, %s23
    %s17 = sphi 0, %s15
    %s18 = sphi 0, %s16
    %s19 = sphi 0, %s17
    %s20 = sphi 0, %s18
    %s32 = sphi 0, %s34
    %s35 = sphi 0, %s32
    %s36 = sphi 0, %s35
    %s52 = sphi 0, %s36
    %s56 = sphi 0, %s56
    %s58 = sphi 0, %s56
    %s59 = sphi 0, %s58
    %s73 = sphi 0, %s59
    %s81 = sphi 0, %s83
    %s84 = sphi 0, %s81
    %s85 = sphi 0, %s84
    %s101 = sphi 0, %s85
  $region4: #{tpu_custom_call.1} parent=0 // loop_header_branch
    %11 = sbr.rel (%p9) target = $region8
  $region5: #{tpu_custom_call.1} parent=0 // loop_body
    %s13 = ssub.s32 %s8, 1
    %s14 = ssub.s32 %s8, 2
    %s21 = sadd.s32 1, %s16
    %p22 = scmp.ge.s32.totalorder %s21, 1
    %s23 = scalar_select %p22, 0, %s21
    %s24 = sadd.s32 1, %s15
    %s25 = scalar_select %p22, %s24, %s15
    %p26 = scmp.ge.s32.totalorder %s25, 2
    %s27 = scalar_select %p26, 0, %s25
    %s28 = ssub.s32 %s15, %s27
    %s29 = ssub.s32 %s16, %s23
    %s30 = sor.u32 %s28, %s29
    %p31 = scmp.eq.s32.totalorder %s30, 0
    %s33 = sadd.s32 %s32, 1
    %s34 = scalar_select %p31, %s32, %s33
    %p37 = pneg %p31
    %p38 = scmp.eq.s32.totalorder %s8, 1
    %p39 = por %p37, %p38
    %p40 = scmp.ne.s32.totalorder %s32, %s35
    %p41 = scmp.eq.s32.totalorder %s8, 0
    %p42 = por %p40, %p41
    %p43 = scmp.ne.s32.totalorder %s32, %s35
    %p44 = scmp.eq.s32.totalorder %s13, 1
    %p45 = por %p43, %p44
    %p46 = scmp.ne.s32.totalorder %s35, %s36
    %p47 = scmp.eq.s32.totalorder %s13, 0
    %p48 = por %p46, %p47
    %p49 = scmp.ne.s32.totalorder %s35, %s36
    %p50 = scmp.eq.s32.totalorder %s14, 1
    %p51 = por %p49, %p50
    %p53 = scmp.ne.s32.totalorder %s36, %s52
    %p54 = scmp.eq.s32.totalorder %s14, 0
    %p55 = por %p53, %p54
    %s57 = sadd.s32 %s56, 1
    %p60 = scmp.eq.s32.totalorder %s8, 1
    %p61 = scmp.ne.s32.totalorder %s56, %s58
    %p62 = scmp.eq.s32.totalorder %s8, 0
    %p63 = por %p61, %p62
    %p64 = scmp.ne.s32.totalorder %s56, %s58
    %p65 = scmp.eq.s32.totalorder %s13, 1
    %p66 = por %p64, %p65
    %p67 = scmp.ne.s32.totalorder %s58, %s59
    %p68 = scmp.eq.s32.totalorder %s13, 0
    %p69 = por %p67, %p68
    %p70 = scmp.ne.s32.totalorder %s58, %s59
    %p71 = scmp.eq.s32.totalorder %s14, 1
    %p72 = por %p70, %p71
    %p74 = scmp.ne.s32.totalorder %s59, %s73
    %p75 = scmp.eq.s32.totalorder %s14, 0
    %p76 = por %p74, %p75
    %s77 = ssub.s32 %s15, %s27
    %s78 = ssub.s32 %s16, %s23
    %s79 = sor.u32 %s77, %s78
    %p80 = scmp.eq.s32.totalorder %s79, 0
    %s82 = sadd.s32 %s81, 1
    %s83 = scalar_select %p80, %s81, %s82
    %p86 = pneg %p80
    %p87 = scmp.eq.s32.totalorder %s8, 1
    %p88 = por %p86, %p87
    %p89 = scmp.ne.s32.totalorder %s81, %s84
    %p90 = scmp.eq.s32.totalorder %s8, 0
    %p91 = por %p89, %p90
    %p92 = scmp.ne.s32.totalorder %s81, %s84
    %p93 = scmp.eq.s32.totalorder %s13, 1
    %p94 = por %p92, %p93
    %p95 = scmp.ne.s32.totalorder %s84, %s85
    %p96 = scmp.eq.s32.totalorder %s13, 0
    %p97 = por %p95, %p96
    %p98 = scmp.ne.s32.totalorder %s84, %s85
    %p99 = scmp.eq.s32.totalorder %s14, 1
    %p100 = por %p98, %p99
    %p102 = scmp.ne.s32.totalorder %s85, %s101
    %p103 = scmp.eq.s32.totalorder %s14, 0
    %p104 = por %p102, %p103
    %p105 = scmp.le.s32.totalorder 1, %s8
    %p106 = scmp.lt.s32.totalorder %s8, 3
    %p107 = pnand %p105, %p106
    %p108 = pneg %p107
    // Predicated region
    $region9: #{tpu_custom_call.1} parent=5 // pred_check
      _
    $region10: #{tpu_custom_call.1} parent=5 // pred_check_branch
      %110 = sbr.rel (%p107) target = $region12
    $region11: #{tpu_custom_call.1} parent=5 // pred_region
      %s111 = ssub.s32 %s8, 1
      // Predicated region
      $region13: #{tpu_custom_call.1} parent=11 // pred_check
        %p112 = pneg %p69
      $region14: #{tpu_custom_call.1} parent=11 // pred_check_branch
        %114 = sbr.rel (%p112) target = $region16
      $region15: #{tpu_custom_call.1} parent=11 // pred_region
        _
      $region16: #{tpu_custom_call.1} parent=11 // pred_fallthru
        _
    $region12: #{tpu_custom_call.1} parent=5 // pred_fallthru
      _
    %p115 = scmp.lt.s32.totalorder %s8, 2
    // Predicated region
    $region17: #{tpu_custom_call.1} parent=5 // pred_check
      %p116 = pneg %p115
    $region18: #{tpu_custom_call.1} parent=5 // pred_check_branch
      %118 = sbr.rel (%p116) target = $region20
    $region19: #{tpu_custom_call.1} parent=5 // pred_region
      // Predicated region
      $region21: #{tpu_custom_call.1} parent=19 // pred_check
        %p119 = pneg %p42
      $region22: #{tpu_custom_call.1} parent=19 // pred_check_branch
        %121 = sbr.rel (%p119) target = $region24
      $region23: #{tpu_custom_call.1} parent=19 // pred_region
        %p122 = scmp.lt.s32.totalorder %s15, 1
        %s123 = scalar_select %p122, %s15, 1
        %p124 = scmp.lt.s32.totalorder %s16, 0
        %s125 = scalar_select %p124, %s16, 0
        %s126 = smul.addr %s123, 16
        %s127 = sadd.s32 %s125, %s126
        %s128 = smul.addr %s127, 8
        %s129 = scalar_lea.vmem %s0, %s128
      $region24: #{tpu_custom_call.1} parent=19 // pred_fallthru
        _
    $region20: #{tpu_custom_call.1} parent=5 // pred_fallthru
      _
    %p130 = scmp.le.s32.totalorder 1, %s8
    %p131 = scmp.lt.s32.totalorder %s8, 3
    %p132 = pnand %p130, %p131
    %p133 = pneg %p132
    // Predicated region
    $region25: #{tpu_custom_call.1} parent=5 // pred_check
      _
    $region26: #{tpu_custom_call.1} parent=5 // pred_check_branch
      %135 = sbr.rel (%p132) target = $region28
    $region27: #{tpu_custom_call.1} parent=5 // pred_region
      %s136 = ssub.s32 %s8, 1
      %p137 = scmp.lt.s32.totalorder %s17, 1
      %s138 = scalar_select %p137, %s17, 1
      %p139 = scmp.lt.s32.totalorder %s18, 0
      %s140 = scalar_select %p139, %s18, 0
      %s141 = smul.addr %s138, 16
      %s142 = sadd.s32 %s140, %s141
      %s143 = smul.addr %s142, 8
      %s144 = scalar_lea.vmem %s0, %s143
      %p145 = pneg %p48
      %p146 = pneg %p45
      %p147 = pneg %p69
      %p148 = pneg %p66
      %p149 = pneg %p97
      %p150 = pneg %p94
      %p151 = scmp.lt.s32.totalorder %s17, 1
      %s152 = scalar_select %p151, %s17, 1
      %p153 = scmp.lt.s32.totalorder %s18, 0
      %s154 = scalar_select %p153, %s18, 0
      %s155 = smul.addr %s152, 16
      %s156 = sadd.s32 %s154, %s155
      %s157 = smul.addr %s156, 8
      %s158 = scalar_lea.vmem %s2, %s157
      %p159 = scmp.lt.s32.totalorder %s17, 1
      %s160 = scalar_select %p159, %s17, 1
      %p161 = scmp.lt.s32.totalorder %s18, 0
      %s162 = scalar_select %p161, %s18, 0
      %s163 = smul.addr %s160, 16
      %s164 = sadd.s32 %s162, %s163
      %s165 = smul.addr %s164, 8
      %s166 = scalar_lea.vmem %s0, %s165
      %p167 = scmp.lt.s32.totalorder %s17, 1
      %s168 = scalar_select %p167, %s17, 1
      %p169 = scmp.lt.s32.totalorder %s18, 0
      %s170 = scalar_select %p169, %s18, 0
      %s171 = smul.addr %s168, 16
      %s172 = sadd.s32 %s170, %s171
      %s173 = smul.addr %s172, 8
      %s174 = scalar_lea.vmem %s2, %s173
      %v175 = vld [vmem:[%s1] sm:$0xff]
      %v176 = vld [vmem:[%s1 + $0x8] sm:$0xff]
      %v177 = vld [vmem:[%s1 + $0x10] sm:$0xff]
      %v178 = vld [vmem:[%s1 + $0x18] sm:$0xff]
      %v179 = vld [vmem:[%s1 + $0x20] sm:$0xff]
      %v180 = vld [vmem:[%s1 + $0x28] sm:$0xff]
      %v181 = vld [vmem:[%s1 + $0x30] sm:$0xff]
      %v182 = vld [vmem:[%s1 + $0x38] sm:$0xff]
      %v183 = vld [vmem:[%s1 + $0x40] sm:$0xff]
      %v184 = vld [vmem:[%s1 + $0x48] sm:$0xff]
      %v185 = vld [vmem:[%s1 + $0x50] sm:$0xff]
      %v186 = vld [vmem:[%s1 + $0x58] sm:$0xff]
      %v187 = vld [vmem:[%s1 + $0x60] sm:$0xff]
      %v188 = vld [vmem:[%s1 + $0x68] sm:$0xff]
      %v189 = vld [vmem:[%s1 + $0x70] sm:$0xff]
      %v190 = vld [vmem:[%s1 + $0x78] sm:$0xff]
      %v191 = vld [vmem:[%s166] sm:$0xff]
      %v192 = vld [vmem:[%s166 + $0x8] sm:$0xff]
      %v193 = vld [vmem:[%s166 + $0x10] sm:$0xff]
      %v194 = vld [vmem:[%s166 + $0x18] sm:$0xff]
      %v195 = vld [vmem:[%s166 + $0x20] sm:$0xff]
      %v196 = vld [vmem:[%s166 + $0x28] sm:$0xff]
      %v197 = vld [vmem:[%s166 + $0x30] sm:$0xff]
      %v198 = vld [vmem:[%s166 + $0x38] sm:$0xff]
      %v199 = vld [vmem:[%s166 + $0x40] sm:$0xff]
      %v200 = vld [vmem:[%s166 + $0x48] sm:$0xff]
      %v201 = vld [vmem:[%s166 + $0x50] sm:$0xff]
      %v202 = vld [vmem:[%s166 + $0x58] sm:$0xff]
      %v203 = vld [vmem:[%s166 + $0x60] sm:$0xff]
      %v204 = vld [vmem:[%s166 + $0x68] sm:$0xff]
      %v205 = vld [vmem:[%s166 + $0x70] sm:$0xff]
      %v206 = vld [vmem:[%s166 + $0x78] sm:$0xff]
      %207 = vmatpush.msra.mxu0 %v206
      %208 = vmatpush.msra.mxu0 %v205
      %209 = vmatpush.msra.mxu0 %v204
      %210 = vmatpush.msra.mxu0 %v203
      %211 = vmatpush.msra.mxu0 %v202
      %212 = vmatpush.msra.mxu0 %v201
      %213 = vmatpush.msra.mxu0 %v200
      %214 = vmatpush.msra.mxu0 %v199
      %215 = vmatpush.msra.mxu0 %v198
      %216 = vmatpush.msra.mxu0 %v197
      %217 = vmatpush.msra.mxu0 %v196
      %218 = vmatpush.msra.mxu0 %v195
      %219 = vmatpush.msra.mxu0 %v194
      %220 = vmatpush.msra.mxu0 %v193
      %221 = vmatpush.msra.mxu0 %v192
      %222 = vmatpush.msra.mxu0 %v191
      %223 = vmatmul.f32.gmra.mxu0 %v175
      %v224 = vpop.f32.mrf.mxu0
      %v225 = vadd.f32 0.0, %v224
      %226 = vmatmul.f32.gmra.mxu0 %v176
      %v227 = vpop.f32.mrf.mxu0
      %v228 = vadd.f32 0.0, %v227
      %229 = vmatmul.f32.gmra.mxu0 %v177
      %v230 = vpop.f32.mrf.mxu0
      %v231 = vadd.f32 0.0, %v230
      %232 = vmatmul.f32.gmra.mxu0 %v178
      %v233 = vpop.f32.mrf.mxu0
      %v234 = vadd.f32 0.0, %v233
      %235 = vmatmul.f32.gmra.mxu0 %v179
      %v236 = vpop.f32.mrf.mxu0
      %v237 = vadd.f32 0.0, %v236
      %238 = vmatmul.f32.gmra.mxu0 %v180
      %v239 = vpop.f32.mrf.mxu0
      %v240 = vadd.f32 0.0, %v239
      %241 = vmatmul.f32.gmra.mxu0 %v181
      %v242 = vpop.f32.mrf.mxu0
      %v243 = vadd.f32 0.0, %v242
      %244 = vmatmul.f32.gmra.mxu0 %v182
      %v245 = vpop.f32.mrf.mxu0
      %v246 = vadd.f32 0.0, %v245
      %247 = vmatmul.f32.gmra.mxu0 %v183
      %v248 = vpop.f32.mrf.mxu0
      %v249 = vadd.f32 0.0, %v248
      %250 = vmatmul.f32.gmra.mxu0 %v184
      %v251 = vpop.f32.mrf.mxu0
      %v252 = vadd.f32 0.0, %v251
      %253 = vmatmul.f32.gmra.mxu0 %v185
      %v254 = vpop.f32.mrf.mxu0
      %v255 = vadd.f32 0.0, %v254
      %256 = vmatmul.f32.gmra.mxu0 %v186
      %v257 = vpop.f32.mrf.mxu0
      %v258 = vadd.f32 0.0, %v257
      %259 = vmatmul.f32.gmra.mxu0 %v187
      %v260 = vpop.f32.mrf.mxu0
      %v261 = vadd.f32 0.0, %v260
      %262 = vmatmul.f32.gmra.mxu0 %v188
      %v263 = vpop.f32.mrf.mxu0
      %v264 = vadd.f32 0.0, %v263
      %265 = vmatmul.f32.gmra.mxu0 %v189
      %v266 = vpop.f32.mrf.mxu0
      %v267 = vadd.f32 0.0, %v266
      %268 = vmatmul.f32.gmra.mxu0 %v190
      %v269 = vpop.f32.mrf.mxu0
      %v270 = vadd.f32 0.0, %v269
      %271 = vdwg.mxu0
      %vm272 = vcmask 523264
      %273 = vst.msk [vmem:[%s174] sm:$0xff] %vm272, %v225
      %274 = vst.msk [vmem:[%s174 + $0x8] sm:$0xff] %vm272, %v228
      %275 = vst.msk [vmem:[%s174 + $0x10] sm:$0xff] %vm272, %v231
      %276 = vst.msk [vmem:[%s174 + $0x18] sm:$0xff] %vm272, %v234
      %277 = vst.msk [vmem:[%s174 + $0x20] sm:$0xff] %vm272, %v237
      %278 = vst.msk [vmem:[%s174 + $0x28] sm:$0xff] %vm272, %v240
      %279 = vst.msk [vmem:[%s174 + $0x30] sm:$0xff] %vm272, %v243
      %280 = vst.msk [vmem:[%s174 + $0x38] sm:$0xff] %vm272, %v246
      %281 = vst.msk [vmem:[%s174 + $0x40] sm:$0xff] %vm272, %v249
      %282 = vst.msk [vmem:[%s174 + $0x48] sm:$0xff] %vm272, %v252
      %283 = vst.msk [vmem:[%s174 + $0x50] sm:$0xff] %vm272, %v255
      %284 = vst.msk [vmem:[%s174 + $0x58] sm:$0xff] %vm272, %v258
      %285 = vst.msk [vmem:[%s174 + $0x60] sm:$0xff] %vm272, %v261
      %286 = vst.msk [vmem:[%s174 + $0x68] sm:$0xff] %vm272, %v264
      %287 = vst.msk [vmem:[%s174 + $0x70] sm:$0xff] %vm272, %v267
      %288 = vst.msk [vmem:[%s174 + $0x78] sm:$0xff] %vm272, %v270
      %p289 = scmp.lt.s32.totalorder %s17, 1
      %s290 = scalar_select %p289, %s17, 1
      %p291 = scmp.lt.s32.totalorder %s18, 0
      %s292 = scalar_select %p291, %s18, 0
      %s293 = smul.addr %s290, 16
      %s294 = sadd.s32 %s292, %s293
      %s295 = smul.addr %s294, 8
      %s296 = scalar_lea.vmem %s2, %s295
      // Predicated region
      $region29: #{tpu_custom_call.1} parent=27 // pred_check
        %p297 = pneg %p94
      $region30: #{tpu_custom_call.1} parent=27 // pred_check_branch
        %299 = sbr.rel (%p297) target = $region32
      $region31: #{tpu_custom_call.1} parent=27 // pred_region
        _
      $region32: #{tpu_custom_call.1} parent=27 // pred_fallthru
        _
    $region28: #{tpu_custom_call.1} parent=5 // pred_fallthru
      _
    %p300 = scmp.le.s32.totalorder 2, %s8
    // Predicated region
    $region33: #{tpu_custom_call.1} parent=5 // pred_check
      %p301 = pneg %p300
    $region34: #{tpu_custom_call.1} parent=5 // pred_check_branch
      %303 = sbr.rel (%p301) target = $region36
    $region35: #{tpu_custom_call.1} parent=5 // pred_region
      %s304 = ssub.s32 %s8, 2
      // Predicated region
      $region37: #{tpu_custom_call.1} parent=35 // pred_check
        %p305 = pneg %p100
      $region38: #{tpu_custom_call.1} parent=35 // pred_check_branch
        %307 = sbr.rel (%p305) target = $region40
      $region39: #{tpu_custom_call.1} parent=35 // pred_region
        %p308 = scmp.lt.s32.totalorder %s19, 1
        %s309 = scalar_select %p308, %s19, 1
        %p310 = scmp.lt.s32.totalorder %s20, 0
        %s311 = scalar_select %p310, %s20, 0
        %s312 = smul.addr %s309, 16
        %s313 = sadd.s32 %s311, %s312
        %s314 = smul.addr %s313, 8
        %s315 = scalar_lea.vmem %s2, %s314
      $region40: #{tpu_custom_call.1} parent=35 // pred_fallthru
        _
    $region36: #{tpu_custom_call.1} parent=5 // pred_fallthru
      _
  $region6: #{tpu_custom_call.1} parent=0 // loop_footer
    %s12 = sadd.s32 1, %s8
  $region7: #{tpu_custom_call.1} parent=0 // loop_footer_branch
    %7 = sbr.rel target = $region3
  $region8: #{tpu_custom_call.1} parent=0 // loop_exit
    _

</llo_original>
